<compile_context>
chip_gen: v7x
topology: tpu7x:2x2x1
jax: 0.10.0
libtpu: 0.0.40
codegen_flags: <defaults>
</compile_context>

<pallas_src>
import jax
import jax.numpy as jnp
from jax.experimental import pallas as pl
from jax.experimental.pallas import tpu as pltpu


def _linear_kernel(x_ref, w_ref, b_ref, o_ref):
    # x_ref: (tm, K)   w_ref: (K, Np)   b_ref: (1, Np) f32   o_ref: (tm, Np)
    acc = jnp.dot(x_ref[...], w_ref[...], preferred_element_type=jnp.float32)
    o_ref[...] = (acc + b_ref[...]).astype(o_ref.dtype)


def _round_up(x, mult):
    return -(-x // mult) * mult


def _vmem_budgets():
    """Per-generation VMEM sizing: ~96 MiB scoped on v5e/v6e (128 MiB phys),
    ~48 MiB on v7x (64 MiB phys); conservative default if the query fails."""
    try:
        phys = int(getattr(pltpu.get_tpu_info(), "vmem_capacity_bytes", 0)) or (64 << 20)
    except Exception:
        phys = 64 << 20
    vmem_limit = min(phys * 3 // 4, 100 << 20)
    tile_budget = vmem_limit - (6 << 20)          # headroom for compiler scratch
    return vmem_limit, tile_budget


def _choose_tm(m, k, n_pad, x_elt, w_elt, out_elt, tile_budget):
    """Pick the largest row tile that fits the VMEM budget, accounting for
    lane padding of the x tile and the f32 accumulator; keep >=4 grid steps
    when m is large (v7x megacore + pipeline overlap); prefer exact divisors
    of m so the ragged (masked) final block path is skipped."""
    sub = 16 if min(x_elt, out_elt) < 4 else 8
    k_lanes = _round_up(k, 128)                   # x-tile minor dim padded to 128 lanes
    k_sub = _round_up(k, 8 * 4 // w_elt)          # weight sublane packing
    fixed = 2 * (k_sub * n_pad * w_elt + 8 * n_pad * 4)   # resident weight + f32 bias

    def tile_bytes(c):
        return (2 * c * k_lanes * x_elt           # x tile, double-buffered, lane-padded
                + 2 * c * n_pad * out_elt         # output tile, double-buffered
                + c * n_pad * 4)                  # f32 matmul accumulator intermediate

    cands = [c for c in (8192, 4096, 2048, 1024, 512, 256, 128, 64, 32, 16, 8)
             if c % sub == 0 and fixed + tile_bytes(c) <= tile_budget]
    if not cands:
        return sub
    largest = cands[0]

    cap = largest
    if m >= 2048:                                 # large m: keep >=4 grid steps
        cap = min(cap, _round_up(-(-m // 4), sub))

    if m <= cap:
        return max(sub, _round_up(m, sub))        # one tile covers all rows
    for c in cands:                               # prefer exact divisor of m
        if c <= cap and m % c == 0 and 2 * c >= cap:
            return c
    for c in cands:
        if c <= cap:
            return c
    return sub


def dsw_embedding(x, weight, bias, *, tm=None, out_dtype=None):
    """y = x @ weight.T + bias  (nn.Linear semantics).

    x:      (..., input_size)
    weight: (hidden_size, input_size)   (PyTorch convention)
    bias:   (hidden_size,)
    tm:     optional explicit row tile (must be a multiple of 8; 16 for bf16)
    out_dtype: output dtype (default x.dtype); pass bf16 to halve writeback traffic
    """
    *lead, k = x.shape
    n, k_w = weight.shape
    assert k_w == k, (weight.shape, k)
    out_dtype = jnp.dtype(out_dtype) if out_dtype is not None else jnp.dtype(x.dtype)

    x2 = x.reshape(-1, k)
    m = x2.shape[0]

    # Lane-dense output: pad hidden dim to a multiple of 128 (unmasked vst).
    n_pad = _round_up(max(n, 128), 128)
    wt = weight.T                                  # one-time tiny (K, N) pass
    if n_pad != n:
        wt = jnp.pad(wt, ((0, 0), (0, n_pad - n)))
        bias = jnp.pad(bias, ((0, n_pad - n),))
    b2 = bias.astype(jnp.float32).reshape(1, n_pad)   # cast once, not per grid step

    x_elt = jnp.dtype(x.dtype).itemsize
    w_elt = jnp.dtype(wt.dtype).itemsize
    o_elt = out_dtype.itemsize

    vmem_limit, tile_budget = _vmem_budgets()
    if tm is None:
        tm = _choose_tm(m, k, n_pad, x_elt, w_elt, o_elt, tile_budget)

    cost = pl.CostEstimate(
        flops=2 * m * k * n_pad,
        transcendentals=0,
        bytes_accessed=(m * k * x_elt + k * n_pad * w_elt + n_pad * 4
                        + m * n_pad * o_elt))

    out = pl.pallas_call(
        _linear_kernel,
        out_shape=jax.ShapeDtypeStruct((m, n_pad), out_dtype),
        grid_spec=pltpu.PrefetchScalarGridSpec(
            num_scalar_prefetch=0,
            grid=(pl.cdiv(m, tm),),
            in_specs=[
                pl.BlockSpec((tm, k), lambda i: (i, 0)),       # activation row tile
                pl.BlockSpec((k, n_pad), lambda i: (0, 0)),    # resident weight (K, N)
                pl.BlockSpec((1, n_pad), lambda i: (0, 0)),    # resident f32 bias
            ],
            out_specs=pl.BlockSpec((tm, n_pad), lambda i: (i, 0)),
        ),
        compiler_params=pltpu.CompilerParams(
            dimension_semantics=("parallel",),      # shards M loop across v7x's 2 TCs
            vmem_limit_bytes=vmem_limit),
        cost_estimate=cost,
    )(x2, wt, b2)

    if n_pad != n:
        out = out[:, :n]
    return out.reshape(*lead, n)


if __name__ == "__main__":
    # Small shapes consistent with the forward: (batch, seq, input_size).
    batch, seq, input_size, hidden_size = 2, 8, 16, 32

    key = jax.random.PRNGKey(0)
    kx, kw, kb = jax.random.split(key, 3)

    x = jax.random.normal(kx, (batch, seq, input_size), dtype=jnp.float32)
    # nn.Linear-shaped parameters: (hidden, input) / (hidden,)
    weight = jax.random.normal(kw, (hidden_size, input_size), dtype=jnp.float32) * 0.1
    bias = jax.random.normal(kb, (hidden_size,), dtype=jnp.float32) * 0.1

    y_ref = x @ weight.T + bias  # plain-JAX reference (same math as nn.Linear)

    # Auto-tiled path (single row tile, lane-padded hidden dim).
    y = jax.block_until_ready(dsw_embedding(x, weight, bias))
    assert y.shape == (batch, seq, hidden_size)
    assert jnp.allclose(y, y_ref, atol=1e-5, rtol=1e-5)

    # Multi-step grid path (explicit small tile) to exercise the pipeline.
    y2 = jax.block_until_ready(dsw_embedding(x, weight, bias, tm=8))
    assert jnp.allclose(y2, y_ref, atol=1e-5, rtol=1e-5)

    # bf16 output path (halves the dominant writeback traffic downstream).
    y3 = jax.block_until_ready(dsw_embedding(x, weight, bias, out_dtype=jnp.bfloat16))
    assert y3.dtype == jnp.bfloat16
    assert jnp.allclose(y3.astype(jnp.float32), y_ref, atol=5e-2, rtol=5e-2)

    print("KERNEL_OK")
</pallas_src>

<mosaic_0001>
module attributes {stable_mosaic.version = 11 : i64} {
  func.func @_linear_kernel(%arg0: i32, %arg1: memref<16x16xf32, #tpu.memory_space<vmem>>, %arg2: memref<16x128xf32, #tpu.memory_space<vmem>>, %arg3: memref<1x128xf32, #tpu.memory_space<vmem>>, %arg4: memref<16x128xf32, #tpu.memory_space<vmem>>) attributes {dimension_semantics = [#tpu.dimension_semantics<parallel>], iteration_bounds = array<i64: 1>, scalar_prefetch = 0 : i64, scratch_operands = 0 : i64, tpu.core_type = #tpu.core_type<tc>, window_params = [{transform_indices = @transform_0, window_bounds = array<i64: 16, 16>}, {pipeline_mode = #tpu.pipeline_mode<synchronous>, transform_indices = @transform_1, window_bounds = array<i64: 16, 128>}, {pipeline_mode = #tpu.pipeline_mode<synchronous>, transform_indices = @transform_2, window_bounds = array<i64: 1, 128>}, {transform_indices = @transform_3, window_bounds = array<i64: 16, 128>}]} {
    %c0 = arith.constant 0 : index
    %c0_0 = arith.constant 0 : index
    %0 = vector.load %arg1[%c0, %c0_0] : memref<16x16xf32, #tpu.memory_space<vmem>>, vector<16x16xf32>
    %c0_1 = arith.constant 0 : index
    %c0_2 = arith.constant 0 : index
    %1 = vector.load %arg2[%c0_1, %c0_2] : memref<16x128xf32, #tpu.memory_space<vmem>>, vector<16x128xf32>
    %cst = arith.constant dense<0.000000e+00> : vector<16x128xf32>
    %2 = tpu.matmul %0, %1, %cst {dimension_numbers = #tpu.dot_dimension_numbers<[1], [0], [0], [1], [0, 0, 1, 1], [], []>} : vector<16x16xf32>, vector<16x128xf32>, vector<16x128xf32> -> vector<16x128xf32>
    %c0_3 = arith.constant 0 : index
    %c0_4 = arith.constant 0 : index
    %3 = vector.load %arg3[%c0_3, %c0_4] : memref<1x128xf32, #tpu.memory_space<vmem>>, vector<1x128xf32>
    %4 = vector.broadcast %3 : vector<1x128xf32> to vector<16x128xf32>
    %5 = arith.addf %2, %4 : vector<16x128xf32>
    %c0_5 = arith.constant 0 : index
    %c0_6 = arith.constant 0 : index
    %6 = vector.load %arg4[%c0_5, %c0_6] : memref<16x128xf32, #tpu.memory_space<vmem>>, vector<16x128xf32>
    tpu.vector_store %arg4[%c0_5, %c0_6], %5 {strides = array<i32>} : memref<16x128xf32, #tpu.memory_space<vmem>>, vector<16x128xf32>,
    return
  }
  func.func @transform_0(%arg0: i32) -> (i32, i32) {
    %c0_i32 = arith.constant 0 : i32
    %c0_i32_0 = arith.constant 0 : i32
    return %arg0, %c0_i32 : i32, i32
  }
  func.func @transform_1(%arg0: i32) -> (i32, i32) {
    %c0_i32 = arith.constant 0 : i32
    %c0_i32_0 = arith.constant 0 : i32
    %c0_i32_1 = arith.constant 0 : i32
    return %c0_i32, %c0_i32_0 : i32, i32
  }
  func.func @transform_2(%arg0: i32) -> (i32, i32) {
    %c0_i32 = arith.constant 0 : i32
    %c0_i32_0 = arith.constant 0 : i32
    %c0_i32_1 = arith.constant 0 : i32
    return %c0_i32, %c0_i32_0 : i32, i32
  }
  func.func @transform_3(%arg0: i32) -> (i32, i32) {
    %c0_i32 = arith.constant 0 : i32
    %c0_i32_0 = arith.constant 0 : i32
    return %arg0, %c0_i32 : i32, i32
  }
}

</mosaic_0001>

<llo_original>
// kernel: tpu_custom_call.1
$region0: #{tpu_custom_call.1}
  #allocation0 [shape = 'u32[]', space=smem, size = 0x4, offset = 0x4, fixed_abs, tag = 'smem constant byte address 0x4 - core index']
  #allocation1 [shape = 'u32[144,128]{1,0:T(1,128)}', space=vmem, size = 0x12000, scoped, tag = 'internal scratch']
  %s0 = inlined_call_operand.hbm [shape: f32[16,16], index: 0, kind: input, shape index: {}]
  %s1 = inlined_call_operand.hbm [shape: f32[16,128], index: 1, kind: input, shape index: {}]
  %s2 = inlined_call_operand.vmem [shape: f32[1,128], index: 2, kind: input, shape index: {}]
  %s3 = inlined_call_operand.hbm [shape: f32[16,128], index: 3, kind: output, shape index: {}]
  %s4 = sld [smem:[#allocation0]]
  $region30: #{tpu_custom_call.1} parent=0
    _
  %s6 = ssub.s32 1, %s4
  %s7 = scalar_select 0, %s6, %s4
  $region1: #{tpu_custom_call.1} parent=0
    #allocation2 [shape = 'u8[8192]{0}', space=vmem, size = 0x2000, scoped, tag = 'input window, operand 0, single buffered']
    #allocation3 [shape = 's32[1]{0}', space=sflag, size = 0x4, scoped, tag = 'scoped memory for tpu_custom_call.1']
    #allocation4 [shape = 's32[1]{0}', space=sflag, size = 0x4, scoped, tag = 'scoped memory for tpu_custom_call.1']
    #allocation5 [shape = 'u8[8192]{0}', space=vmem, size = 0x2000, scoped, tag = 'input window, operand 1, single buffered']
    #allocation6 [shape = 's32[1]{0}', space=sflag, size = 0x4, scoped, tag = 'scoped memory for tpu_custom_call.1']
    #allocation7 [shape = 'u8[8192]{0}', space=vmem, size = 0x2000, scoped, tag = 'output window, operand 0, single buffered']
    %8 = vsyncpa [#allocation3], 0
    %9 = vsyncpa [#allocation6], 0
    %10 = vsyncpa [#allocation4], 0
    // Predicated region
    $region2: #{tpu_custom_call.1} parent=1 // pred_check
      _
    $region3: #{tpu_custom_call.1} parent=1 // pred_check_branch
      %12 = sbr.rel (0) target = $region5
    $region4: #{tpu_custom_call.1} parent=1 // pred_region
      %s14 = ssub.s32 256, 256
      %15 = vsyncadd [#allocation3], %s14
      %s16 = sshll.u32 [#allocation2], 4
      %s17 = int_to_ptr.vmem [resolvable:$true] %s16
      %22 = dma.hbm_to_vmem [thread:$0]  %s0, 256, %s17, [#allocation3], 128, 128, 8
    $region5: #{tpu_custom_call.1} parent=1 // pred_fallthru
      _
    // Predicated region
    $region6: #{tpu_custom_call.1} parent=1 // pred_check
      _
    $region7: #{tpu_custom_call.1} parent=1 // pred_check_branch
      %24 = sbr.rel (0) target = $region9
    $region8: #{tpu_custom_call.1} parent=1 // pred_region
      %s26 = ssub.s32 256, 256
      %27 = vsyncadd [#allocation6], %s26
      %s28 = sshll.u32 [#allocation5], 4
      %s29 = int_to_ptr.vmem [resolvable:$true] %s28
      %34 = dma.hbm_to_vmem [thread:$0]  %s1, 256, %s29, [#allocation6], 128, 128, 8
    $region9: #{tpu_custom_call.1} parent=1 // pred_fallthru
      _
    // Predicated region
    $region10: #{tpu_custom_call.1} parent=1 // pred_check
      _
    $region11: #{tpu_custom_call.1} parent=1 // pred_check_branch
      %36 = sbr.rel (0) target = $region13
    $region12: #{tpu_custom_call.1} parent=1 // pred_region
      _
    $region13: #{tpu_custom_call.1} parent=1 // pred_fallthru
      _
    // Predicated region
    $region14: #{tpu_custom_call.1} parent=1 // pred_check
      _
    $region15: #{tpu_custom_call.1} parent=1 // pred_check_branch
      %38 = sbr.rel (0) target = $region17
    $region16: #{tpu_custom_call.1} parent=1 // pred_region
      %39 = dma.done [#allocation3], 256
    $region17: #{tpu_custom_call.1} parent=1 // pred_fallthru
      _
    // Predicated region
    $region18: #{tpu_custom_call.1} parent=1 // pred_check
      _
    $region19: #{tpu_custom_call.1} parent=1 // pred_check_branch
      %41 = sbr.rel (0) target = $region21
    $region20: #{tpu_custom_call.1} parent=1 // pred_region
      %42 = dma.done [#allocation6], 256
    $region21: #{tpu_custom_call.1} parent=1 // pred_fallthru
      _
    %v43 = vld [vmem:[#allocation2] sm:$0xff]
    %v44 = vld [vmem:[#allocation2 + $0x8] sm:$0xff]
    %v45 = vld [vmem:[#allocation5] sm:$0xff]
    %v46 = vld [vmem:[#allocation5 + $0x8] sm:$0xff]
    %v47 = vld [vmem:[%s2] sm:$0x1]
    %v49 = vlaneseq
    %v50 = vshrl.u32 %v49, 7
    %v51 = vsub.s32 0, %v50
    %v52 = vrot.slane %v47, %v51
    %vm54 = vcmask 130048
    %v56 = vsel %vm54, %v43, 0
    %v59 = vsel %vm54, %v44, 0
    %61 = vmatprep.subr.mxu0 0.0
    %62 = vmatpush1.msra.mxu0 %v45
    %63 = vmatprep.subr.mxu0 0.0
    %64 = vmatpush1.msra.mxu0 %v46
    %65 = vmatprep.subr.mxu0 0.0
    %66 = vmatpush1.msra.mxu0 0.0
    %67 = vmatprep.subr.mxu0 0.0
    %68 = vmatpush1.msra.mxu0 0.0
    %69 = vmatprep.subr.mxu0 0.0
    %70 = vmatpush1.msra.mxu0 0.0
    %71 = vmatprep.subr.mxu0 0.0
    %72 = vmatpush1.msra.mxu0 0.0
    %73 = vmatprep.subr.mxu0 0.0
    %74 = vmatpush1.msra.mxu0 0.0
    %75 = vmatprep.subr.mxu0 0.0
    %76 = vmatpush1.msra.mxu0 0.0
    %77 = vmatprep.subr.mxu0 0.0
    %78 = vmatpush1.msra.mxu0 0.0
    %79 = vmatprep.subr.mxu0 0.0
    %80 = vmatpush1.msra.mxu0 0.0
    %81 = vmatprep.subr.mxu0 0.0
    %82 = vmatpush1.msra.mxu0 0.0
    %83 = vmatprep.subr.mxu0 0.0
    %84 = vmatpush1.msra.mxu0 0.0
    %85 = vmatprep.subr.mxu0 0.0
    %86 = vmatpush1.msra.mxu0 0.0
    %87 = vmatprep.subr.mxu0 0.0
    %88 = vmatpush1.msra.mxu0 0.0
    %89 = vmatprep.subr.mxu0 0.0
    %90 = vmatpush1.msra.mxu0 0.0
    %91 = vmatprep.subr.mxu0 0.0
    %92 = vmatpush1.msra.mxu0 0.0
    %93 = vmatprep.subr.mxu0 0.0
    %94 = vmatpush1.msra.mxu0 0.0
    %95 = vmatprep.subr.mxu0 0.0
    %96 = vmatpush1.msra.mxu0 0.0
    %97 = vmatprep.subr.mxu0 0.0
    %98 = vmatpush1.msra.mxu0 0.0
    %99 = vmatprep.subr.mxu0 0.0
    %100 = vmatpush1.msra.mxu0 0.0
    %101 = vmatprep.subr.mxu0 0.0
    %102 = vmatpush1.msra.mxu0 0.0
    %103 = vmatprep.subr.mxu0 0.0
    %104 = vmatpush1.msra.mxu0 0.0
    %105 = vmatprep.subr.mxu0 0.0
    %106 = vmatpush1.msra.mxu0 0.0
    %107 = vmatprep.subr.mxu0 0.0
    %108 = vmatpush1.msra.mxu0 0.0
    %109 = vmatprep.subr.mxu0 0.0
    %110 = vmatpush1.msra.mxu0 0.0
    %111 = vmatprep.subr.mxu0 0.0
    %112 = vmatpush1.msra.mxu0 0.0
    %113 = vmatprep.subr.mxu0 0.0
    %114 = vmatpush1.msra.mxu0 0.0
    %115 = vmatprep.subr.mxu0 0.0
    %116 = vmatpush1.msra.mxu0 0.0
    %117 = vmatprep.subr.mxu0 0.0
    %118 = vmatpush1.msra.mxu0 0.0
    %119 = vmatprep.subr.mxu0 0.0
    %120 = vmatpush1.msra.mxu0 0.0
    %121 = vmatprep.subr.mxu0 0.0
    %122 = vmatpush1.msra.mxu0 0.0
    %123 = vmatprep.subr.mxu0 0.0
    %124 = vmatpush1.msra.mxu0 0.0
    %125 = vmatprep.mubr.f32.mxu0 0.0
    %126 = vmatmul.mubr.f32.gmra.mrb[0].mxu0 %v56
    %v127 = vpop.f32.mrb[0].mxu0
    %v128 = vadd.f32 %v52, %v127
    %v129 = vpop.f32.mrb[0].mxu0
    %130 = vmatprep.mubr.f32.mxu0 0.0
    %131 = vmatmul.mubr.f32.gmra.mrb[0].mxu0 %v59
    %v132 = vpop.f32.mrb[0].mxu0
    %v133 = vadd.f32 %v52, %v132
    %v134 = vpop.f32.mrb[0].mxu0
    %135 = vdwg.mxu0
    %136 = vst [vmem:[#allocation7] sm:$0xff] %v128
    %137 = vst [vmem:[#allocation7 + $0x8] sm:$0xff] %v133
    // Predicated region
    $region22: #{tpu_custom_call.1} parent=1 // pred_check
      _
    $region23: #{tpu_custom_call.1} parent=1 // pred_check_branch
      %139 = sbr.rel (0) target = $region25
    $region24: #{tpu_custom_call.1} parent=1 // pred_region
      %s141 = ssub.s32 256, 256
      %142 = vsyncadd [#allocation4], %s141
      %s143 = sshll.u32 [#allocation7], 4
      %s144 = int_to_ptr.vmem [resolvable:$true] %s143
      %149 = dma.vmem_to_hbm [thread:$0]  %s144, 256, %s3, [#allocation4], 128, 128, 8
    $region25: #{tpu_custom_call.1} parent=1 // pred_fallthru
      _
    // Predicated region
    $region26: #{tpu_custom_call.1} parent=1 // pred_check
      _
    $region27: #{tpu_custom_call.1} parent=1 // pred_check_branch
      %151 = sbr.rel (0) target = $region29
    $region28: #{tpu_custom_call.1} parent=1 // pred_region
      %152 = dma.done [#allocation4], 256
    $region29: #{tpu_custom_call.1} parent=1 // pred_fallthru
      _
    %153 = vsyncpa [#allocation3], 1
    %154 = vsyncpa [#allocation6], 1
    %155 = vsyncpa [#allocation4], 1

</llo_original>
